<compile_context>
chip_gen: v7x
topology: tpu7x:2x2x1
jax: 0.10.0
libtpu: 0.0.40
codegen_flags: <defaults>
</compile_context>

<pallas_src>
import jax
import jax.numpy as jnp
from jax.experimental import pallas as pl
from jax.experimental.pallas import tpu as pltpu

n_azimuth = 16
n_eccentricity = 4
n_phase = 1
n_theta = 8
width = 32

IN_CHAN = n_eccentricity * n_azimuth * n_theta * n_phase   # 512
OUT_CHAN = width * width                                   # 1024


def _round_up(x, m):
    return ((x + m - 1) // m) * m


def _linear_kernel(x_ref, wt_ref, b_ref, o_ref):
    """One (tm, N) output tile: full-K canonical MXU matmul + bias."""
    out = jnp.dot(x_ref[...], wt_ref[...], preferred_element_type=jnp.float32)
    o_ref[...] = (out + b_ref[...]).astype(o_ref.dtype)


def prepare_params(weight, bias):
    """One-time (outside jit) transpose of the PyTorch (N, K) weight to (K, N)."""
    weight_t = jnp.transpose(jnp.asarray(weight))          # (K, N), done once
    bias2 = jnp.asarray(bias).reshape(1, -1)               # (1, N) for 2-D tiling
    return weight_t, bias2


@jax.jit
def inverse_log_gabor_mapper(x, weight_t, bias2):
    """Pallas implementation of nn.Linear: x @ weight.T + bias.

    x:        (B, K) float32
    weight_t: (K, N) float32   (pre-transposed once via prepare_params)
    bias2:    (1, N) float32
    returns   (B, N) float32
    """
    B, K = x.shape
    Kw, N = weight_t.shape
    assert K == Kw

    # Batch tile: single step for small B, 512-row tiles for large B.
    tm = min(512, _round_up(B, 8))
    Bp = _round_up(B, tm)
    xp = jnp.pad(x, ((0, Bp - B), (0, 0))) if Bp != B else x

    grid = (Bp // tm,)

    out = pl.pallas_call(
        _linear_kernel,
        out_shape=jax.ShapeDtypeStruct((Bp, N), x.dtype),
        grid_spec=pltpu.PrefetchScalarGridSpec(
            num_scalar_prefetch=0,
            grid=grid,
            in_specs=[
                pl.BlockSpec((tm, K), lambda i: (i, 0)),   # x tile (full K)
                pl.BlockSpec((K, N), lambda i: (0, 0)),    # whole weight, resident
                pl.BlockSpec((1, N), lambda i: (0, 0)),    # whole bias, resident
            ],
            out_specs=pl.BlockSpec((tm, N), lambda i: (i, 0)),  # lane-dense store
        ),
        compiler_params=pltpu.CompilerParams(
            # Batch tiles are independent: shards across the 2 TCs on v7x,
            # harmless on v5e/v6e.
            dimension_semantics=("parallel",),
            # Explicit headroom; actual usage ~10 MiB at tm=512 (weight 2 MiB
            # + double-buffered x/out), safe on v7x's 64 MiB VMEM.
            vmem_limit_bytes=32 * 1024 * 1024,
        ),
    )(xp, weight_t, bias2)

    return out[:B] if Bp != B else out


def init_params(key, in_chan=IN_CHAN, out_chan=OUT_CHAN):
    """Deterministic PyTorch-Linear-style init: U(-1/sqrt(K), 1/sqrt(K))."""
    kw, kb = jax.random.split(key)
    bound = 1.0 / jnp.sqrt(jnp.float32(in_chan))
    weight = jax.random.uniform(
        kw, (out_chan, in_chan), jnp.float32, minval=-bound, maxval=bound
    )
    bias = jax.random.uniform(
        kb, (out_chan,), jnp.float32, minval=-bound, maxval=bound
    )
    return weight, bias


if __name__ == "__main__":
    key = jax.random.PRNGKey(0)
    k_x, k_p = jax.random.split(key)

    batch = 8
    x = jax.random.normal(k_x, (batch, IN_CHAN), jnp.float32)
    weight, bias = init_params(k_p)            # PyTorch (N, K) / (N,) layout
    weight_t, bias2 = prepare_params(weight, bias)   # one-time transpose, outside jit

    out = inverse_log_gabor_mapper(x, weight_t, bias2)
    out = jax.block_until_ready(out)

    # sanity check vs plain-JAX reference (PyTorch Linear semantics)
    ref = x @ weight.T + bias
    assert out.shape == (batch, OUT_CHAN)
    assert jnp.allclose(out, ref, atol=1e-4, rtol=1e-4)

    print("KERNEL_OK")
</pallas_src>

<mosaic_0001>
module attributes {stable_mosaic.version = 11 : i64} {
  func.func @_linear_kernel(%arg0: i32, %arg1: memref<8x512xf32, #tpu.memory_space<vmem>>, %arg2: memref<512x1024xf32, #tpu.memory_space<vmem>>, %arg3: memref<1x1024xf32, #tpu.memory_space<vmem>>, %arg4: memref<8x1024xf32, #tpu.memory_space<vmem>>) attributes {dimension_semantics = [#tpu.dimension_semantics<parallel>], iteration_bounds = array<i64: 1>, scalar_prefetch = 0 : i64, scratch_operands = 0 : i64, tpu.core_type = #tpu.core_type<tc>, window_params = [{transform_indices = @transform_0, window_bounds = array<i64: 8, 512>}, {pipeline_mode = #tpu.pipeline_mode<synchronous>, transform_indices = @transform_1, window_bounds = array<i64: 512, 1024>}, {pipeline_mode = #tpu.pipeline_mode<synchronous>, transform_indices = @transform_2, window_bounds = array<i64: 1, 1024>}, {transform_indices = @transform_3, window_bounds = array<i64: 8, 1024>}]} {
    %c0 = arith.constant 0 : index
    %c0_0 = arith.constant 0 : index
    %0 = vector.load %arg1[%c0, %c0_0] : memref<8x512xf32, #tpu.memory_space<vmem>>, vector<8x512xf32>
    %c0_1 = arith.constant 0 : index
    %c0_2 = arith.constant 0 : index
    %1 = vector.load %arg2[%c0_1, %c0_2] : memref<512x1024xf32, #tpu.memory_space<vmem>>, vector<512x1024xf32>
    %cst = arith.constant dense<0.000000e+00> : vector<8x1024xf32>
    %2 = tpu.matmul %0, %1, %cst {dimension_numbers = #tpu.dot_dimension_numbers<[1], [0], [0], [1], [0, 0, 1, 1], [], []>} : vector<8x512xf32>, vector<512x1024xf32>, vector<8x1024xf32> -> vector<8x1024xf32>
    %c0_3 = arith.constant 0 : index
    %c0_4 = arith.constant 0 : index
    %3 = vector.load %arg3[%c0_3, %c0_4] : memref<1x1024xf32, #tpu.memory_space<vmem>>, vector<1x1024xf32>
    %4 = vector.broadcast %3 : vector<1x1024xf32> to vector<8x1024xf32>
    %5 = arith.addf %2, %4 : vector<8x1024xf32>
    %c0_5 = arith.constant 0 : index
    %c0_6 = arith.constant 0 : index
    %6 = vector.load %arg4[%c0_5, %c0_6] : memref<8x1024xf32, #tpu.memory_space<vmem>>, vector<8x1024xf32>
    tpu.vector_store %arg4[%c0_5, %c0_6], %5 {strides = array<i32>} : memref<8x1024xf32, #tpu.memory_space<vmem>>, vector<8x1024xf32>,
    return
  }
  func.func @transform_0(%arg0: i32) -> (i32, i32) {
    %c0_i32 = arith.constant 0 : i32
    %c0_i32_0 = arith.constant 0 : i32
    return %arg0, %c0_i32 : i32, i32
  }
  func.func @transform_1(%arg0: i32) -> (i32, i32) {
    %c0_i32 = arith.constant 0 : i32
    %c0_i32_0 = arith.constant 0 : i32
    %c0_i32_1 = arith.constant 0 : i32
    return %c0_i32, %c0_i32_0 : i32, i32
  }
  func.func @transform_2(%arg0: i32) -> (i32, i32) {
    %c0_i32 = arith.constant 0 : i32
    %c0_i32_0 = arith.constant 0 : i32
    %c0_i32_1 = arith.constant 0 : i32
    return %c0_i32, %c0_i32_0 : i32, i32
  }
  func.func @transform_3(%arg0: i32) -> (i32, i32) {
    %c0_i32 = arith.constant 0 : i32
    %c0_i32_0 = arith.constant 0 : i32
    return %arg0, %c0_i32 : i32, i32
  }
}

</mosaic_0001>

<llo_original>
// kernel: inverse_log_gabor_mapper.1
$region0: #{inverse_log_gabor_mapper.1}
  #allocation0 [shape = 'u32[]', space=smem, size = 0x4, offset = 0x4, fixed_abs, tag = 'smem constant byte address 0x4 - core index']
  #allocation1 [shape = 'u32[144,128]{1,0:T(1,128)}', space=vmem, size = 0x12000, scoped, tag = 'internal scratch']
  %s0 = inlined_call_operand.hbm [shape: f32[8,512], index: 0, kind: input, shape index: {}]
  %s1 = inlined_call_operand.hbm [shape: f32[512,1024], index: 1, kind: input, shape index: {}]
  %s2 = inlined_call_operand.hbm [shape: f32[1,1024], index: 2, kind: input, shape index: {}]
  %s3 = inlined_call_operand.hbm [shape: f32[8,1024], index: 3, kind: output, shape index: {}]
  %s4 = sld [smem:[#allocation0]]
  $region34: #{inverse_log_gabor_mapper.1} parent=0
    _
  %s6 = ssub.s32 1, %s4
  %s7 = scalar_select 0, %s6, %s4
  $region1: #{inverse_log_gabor_mapper.1} parent=0
    #allocation2 [shape = 'u8[16384]{0}', space=vmem, size = 0x4000, scoped, tag = 'input window, operand 0, single buffered']
    #allocation3 [shape = 's32[1]{0}', space=sflag, size = 0x4, scoped, tag = 'scoped memory for inverse_log_gabor_mapper.1']
    #allocation4 [shape = 's32[1]{0}', space=sflag, size = 0x4, scoped, tag = 'scoped memory for inverse_log_gabor_mapper.1']
    #allocation5 [shape = 'u8[2097152]{0}', space=vmem, size = 0x200000, scoped, tag = 'input window, operand 1, single buffered']
    #allocation6 [shape = 's32[1]{0}', space=sflag, size = 0x4, scoped, tag = 'scoped memory for inverse_log_gabor_mapper.1']
    #allocation7 [shape = 'u8[4096]{0}', space=vmem, size = 0x1000, scoped, tag = 'input window, operand 2, single buffered']
    #allocation8 [shape = 'u8[32768]{0}', space=vmem, size = 0x8000, scoped, tag = 'output window, operand 0, single buffered']
    %8 = vsyncpa [#allocation3], 0
    %9 = vsyncpa [#allocation6], 0
    %10 = vsyncpa [#allocation4], 0
    // Predicated region
    $region2: #{inverse_log_gabor_mapper.1} parent=1 // pred_check
      _
    $region3: #{inverse_log_gabor_mapper.1} parent=1 // pred_check_branch
      %12 = sbr.rel (0) target = $region5
    $region4: #{inverse_log_gabor_mapper.1} parent=1 // pred_region
      %s14 = ssub.s32 512, 512
      %15 = vsyncadd [#allocation3], %s14
      %s17 = sshll.u32 [#allocation2], 4
      %s18 = int_to_ptr.vmem [resolvable:$true] %s17
      %20 = dma.hbm_to_vmem [thread:$0]  %s0, 512, %s18, [#allocation3]
    $region5: #{inverse_log_gabor_mapper.1} parent=1 // pred_fallthru
      _
    // Predicated region
    $region6: #{inverse_log_gabor_mapper.1} parent=1 // pred_check
      _
    $region7: #{inverse_log_gabor_mapper.1} parent=1 // pred_check_branch
      %22 = sbr.rel (0) target = $region9
    $region8: #{inverse_log_gabor_mapper.1} parent=1 // pred_region
      %s24 = ssub.s32 65536, 65536
      %25 = vsyncadd [#allocation6], %s24
      %s26 = sshll.u32 [#allocation5], 4
      %s27 = int_to_ptr.vmem [resolvable:$true] %s26
      %32 = dma.hbm_to_vmem [thread:$0]  %s1, 65536, %s27, [#allocation6], 1024, 1024, 64
    $region9: #{inverse_log_gabor_mapper.1} parent=1 // pred_fallthru
      _
    // Predicated region
    $region10: #{inverse_log_gabor_mapper.1} parent=1 // pred_check
      _
    $region11: #{inverse_log_gabor_mapper.1} parent=1 // pred_check_branch
      %34 = sbr.rel (0) target = $region13
    $region12: #{inverse_log_gabor_mapper.1} parent=1 // pred_region
      %s36 = ssub.s32 128, 128
      %37 = vsyncadd [#allocation6], %s36
      %s39 = sshll.u32 [#allocation7], 4
      %s40 = int_to_ptr.vmem [resolvable:$true] %s39
      %42 = dma.hbm_to_vmem [thread:$0]  %s2, 128, %s40, [#allocation6]
    $region13: #{inverse_log_gabor_mapper.1} parent=1 // pred_fallthru
      _
    // Predicated region
    $region14: #{inverse_log_gabor_mapper.1} parent=1 // pred_check
      _
    $region15: #{inverse_log_gabor_mapper.1} parent=1 // pred_check_branch
      %44 = sbr.rel (0) target = $region17
    $region16: #{inverse_log_gabor_mapper.1} parent=1 // pred_region
      %45 = dma.done [#allocation3], 512
    $region17: #{inverse_log_gabor_mapper.1} parent=1 // pred_fallthru
      _
    // Predicated region
    $region18: #{inverse_log_gabor_mapper.1} parent=1 // pred_check
      _
    $region19: #{inverse_log_gabor_mapper.1} parent=1 // pred_check_branch
      %47 = sbr.rel (0) target = $region21
    $region20: #{inverse_log_gabor_mapper.1} parent=1 // pred_region
      %48 = dma.done [#allocation6], 65536
    $region21: #{inverse_log_gabor_mapper.1} parent=1 // pred_fallthru
      _
    // Predicated region
    $region22: #{inverse_log_gabor_mapper.1} parent=1 // pred_check
      _
    $region23: #{inverse_log_gabor_mapper.1} parent=1 // pred_check_branch
      %50 = sbr.rel (0) target = $region25
    $region24: #{inverse_log_gabor_mapper.1} parent=1 // pred_region
      %51 = dma.done [#allocation6], 128
    $region25: #{inverse_log_gabor_mapper.1} parent=1 // pred_fallthru
      _
    %v52 = vld [vmem:[#allocation2] sm:$0xff]
    %v53 = vld [vmem:[#allocation2 + $0x8] sm:$0xff]
    %v54 = vld [vmem:[#allocation2 + $0x10] sm:$0xff]
    %v55 = vld [vmem:[#allocation2 + $0x18] sm:$0xff]
    %v56 = vld [vmem:[#allocation5] sm:$0xff]
    %v57 = vld [vmem:[#allocation5 + $0x8] sm:$0xff]
    %v58 = vld [vmem:[#allocation5 + $0x10] sm:$0xff]
    %v59 = vld [vmem:[#allocation5 + $0x18] sm:$0xff]
    %v60 = vld [vmem:[#allocation5 + $0x20] sm:$0xff]
    %v61 = vld [vmem:[#allocation5 + $0x28] sm:$0xff]
    %v62 = vld [vmem:[#allocation5 + $0x30] sm:$0xff]
    %v63 = vld [vmem:[#allocation5 + $0x38] sm:$0xff]
    %v64 = vld [vmem:[#allocation5 + $0x40] sm:$0xff]
    %v65 = vld [vmem:[#allocation5 + $0x48] sm:$0xff]
    %v66 = vld [vmem:[#allocation5 + $0x50] sm:$0xff]
    %v67 = vld [vmem:[#allocation5 + $0x58] sm:$0xff]
    %v68 = vld [vmem:[#allocation5 + $0x60] sm:$0xff]
    %v69 = vld [vmem:[#allocation5 + $0x68] sm:$0xff]
    %v70 = vld [vmem:[#allocation5 + $0x70] sm:$0xff]
    %v71 = vld [vmem:[#allocation5 + $0x78] sm:$0xff]
    %v72 = vld [vmem:[#allocation5 + $0x80] sm:$0xff]
    %v73 = vld [vmem:[#allocation5 + $0x88] sm:$0xff]
    %v74 = vld [vmem:[#allocation5 + $0x90] sm:$0xff]
    %v75 = vld [vmem:[#allocation5 + $0x98] sm:$0xff]
    %v76 = vld [vmem:[#allocation5 + $0xa0] sm:$0xff]
    %v77 = vld [vmem:[#allocation5 + $0xa8] sm:$0xff]
    %v78 = vld [vmem:[#allocation5 + $0xb0] sm:$0xff]
    %v79 = vld [vmem:[#allocation5 + $0xb8] sm:$0xff]
    %v80 = vld [vmem:[#allocation5 + $0xc0] sm:$0xff]
    %v81 = vld [vmem:[#allocation5 + $0xc8] sm:$0xff]
    %v82 = vld [vmem:[#allocation5 + $0xd0] sm:$0xff]
    %v83 = vld [vmem:[#allocation5 + $0xd8] sm:$0xff]
    %v84 = vld [vmem:[#allocation5 + $0xe0] sm:$0xff]
    %v85 = vld [vmem:[#allocation5 + $0xe8] sm:$0xff]
    %v86 = vld [vmem:[#allocation5 + $0xf0] sm:$0xff]
    %v87 = vld [vmem:[#allocation5 + $0xf8] sm:$0xff]
    %v88 = vld [vmem:[#allocation5 + $0x100] sm:$0xff]
    %v89 = vld [vmem:[#allocation5 + $0x108] sm:$0xff]
    %v90 = vld [vmem:[#allocation5 + $0x110] sm:$0xff]
    %v91 = vld [vmem:[#allocation5 + $0x118] sm:$0xff]
    %v92 = vld [vmem:[#allocation5 + $0x120] sm:$0xff]
    %v93 = vld [vmem:[#allocation5 + $0x128] sm:$0xff]
    %v94 = vld [vmem:[#allocation5 + $0x130] sm:$0xff]
    %v95 = vld [vmem:[#allocation5 + $0x138] sm:$0xff]
    %v96 = vld [vmem:[#allocation5 + $0x140] sm:$0xff]
    %v97 = vld [vmem:[#allocation5 + $0x148] sm:$0xff]
    %v98 = vld [vmem:[#allocation5 + $0x150] sm:$0xff]
    %v99 = vld [vmem:[#allocation5 + $0x158] sm:$0xff]
    %v100 = vld [vmem:[#allocation5 + $0x160] sm:$0xff]
    %v101 = vld [vmem:[#allocation5 + $0x168] sm:$0xff]
    %v102 = vld [vmem:[#allocation5 + $0x170] sm:$0xff]
    %v103 = vld [vmem:[#allocation5 + $0x178] sm:$0xff]
    %v104 = vld [vmem:[#allocation5 + $0x180] sm:$0xff]
    %v105 = vld [vmem:[#allocation5 + $0x188] sm:$0xff]
    %v106 = vld [vmem:[#allocation5 + $0x190] sm:$0xff]
    %v107 = vld [vmem:[#allocation5 + $0x198] sm:$0xff]
    %v108 = vld [vmem:[#allocation5 + $0x1a0] sm:$0xff]
    %v109 = vld [vmem:[#allocation5 + $0x1a8] sm:$0xff]
    %v110 = vld [vmem:[#allocation5 + $0x1b0] sm:$0xff]
    %v111 = vld [vmem:[#allocation5 + $0x1b8] sm:$0xff]
    %v112 = vld [vmem:[#allocation5 + $0x1c0] sm:$0xff]
    %v113 = vld [vmem:[#allocation5 + $0x1c8] sm:$0xff]
    %v114 = vld [vmem:[#allocation5 + $0x1d0] sm:$0xff]
    %v115 = vld [vmem:[#allocation5 + $0x1d8] sm:$0xff]
    %v116 = vld [vmem:[#allocation5 + $0x1e0] sm:$0xff]
    %v117 = vld [vmem:[#allocation5 + $0x1e8] sm:$0xff]
    %v118 = vld [vmem:[#allocation5 + $0x1f0] sm:$0xff]
    %v119 = vld [vmem:[#allocation5 + $0x1f8] sm:$0xff]
    %v120 = vld [vmem:[#allocation5 + $0x200] sm:$0xff]
    %v121 = vld [vmem:[#allocation5 + $0x208] sm:$0xff]
    %v122 = vld [vmem:[#allocation5 + $0x210] sm:$0xff]
    %v123 = vld [vmem:[#allocation5 + $0x218] sm:$0xff]
    %v124 = vld [vmem:[#allocation5 + $0x220] sm:$0xff]
    %v125 = vld [vmem:[#allocation5 + $0x228] sm:$0xff]
    %v126 = vld [vmem:[#allocation5 + $0x230] sm:$0xff]
    %v127 = vld [vmem:[#allocation5 + $0x238] sm:$0xff]
    %v128 = vld [vmem:[#allocation5 + $0x240] sm:$0xff]
    %v129 = vld [vmem:[#allocation5 + $0x248] sm:$0xff]
    %v130 = vld [vmem:[#allocation5 + $0x250] sm:$0xff]
    %v131 = vld [vmem:[#allocation5 + $0x258] sm:$0xff]
    %v132 = vld [vmem:[#allocation5 + $0x260] sm:$0xff]
    %v133 = vld [vmem:[#allocation5 + $0x268] sm:$0xff]
    %v134 = vld [vmem:[#allocation5 + $0x270] sm:$0xff]
    %v135 = vld [vmem:[#allocation5 + $0x278] sm:$0xff]
    %v136 = vld [vmem:[#allocation5 + $0x280] sm:$0xff]
    %v137 = vld [vmem:[#allocation5 + $0x288] sm:$0xff]
    %v138 = vld [vmem:[#allocation5 + $0x290] sm:$0xff]
    %v139 = vld [vmem:[#allocation5 + $0x298] sm:$0xff]
    %v140 = vld [vmem:[#allocation5 + $0x2a0] sm:$0xff]
    %v141 = vld [vmem:[#allocation5 + $0x2a8] sm:$0xff]
    %v142 = vld [vmem:[#allocation5 + $0x2b0] sm:$0xff]
    %v143 = vld [vmem:[#allocation5 + $0x2b8] sm:$0xff]
    %v144 = vld [vmem:[#allocation5 + $0x2c0] sm:$0xff]
    %v145 = vld [vmem:[#allocation5 + $0x2c8] sm:$0xff]
    %v146 = vld [vmem:[#allocation5 + $0x2d0] sm:$0xff]
    %v147 = vld [vmem:[#allocation5 + $0x2d8] sm:$0xff]
    %v148 = vld [vmem:[#allocation5 + $0x2e0] sm:$0xff]
    %v149 = vld [vmem:[#allocation5 + $0x2e8] sm:$0xff]
    %v150 = vld [vmem:[#allocation5 + $0x2f0] sm:$0xff]
    %v151 = vld [vmem:[#allocation5 + $0x2f8] sm:$0xff]
    %v152 = vld [vmem:[#allocation5 + $0x300] sm:$0xff]
    %v153 = vld [vmem:[#allocation5 + $0x308] sm:$0xff]
    %v154 = vld [vmem:[#allocation5 + $0x310] sm:$0xff]
    %v155 = vld [vmem:[#allocation5 + $0x318] sm:$0xff]
    %v156 = vld [vmem:[#allocation5 + $0x320] sm:$0xff]
    %v157 = vld [vmem:[#allocation5 + $0x328] sm:$0xff]
    %v158 = vld [vmem:[#allocation5 + $0x330] sm:$0xff]
    %v159 = vld [vmem:[#allocation5 + $0x338] sm:$0xff]
    %v160 = vld [vmem:[#allocation5 + $0x340] sm:$0xff]
    %v161 = vld [vmem:[#allocation5 + $0x348] sm:$0xff]
    %v162 = vld [vmem:[#allocation5 + $0x350] sm:$0xff]
    %v163 = vld [vmem:[#allocation5 + $0x358] sm:$0xff]
    %v164 = vld [vmem:[#allocation5 + $0x360] sm:$0xff]
    %v165 = vld [vmem:[#allocation5 + $0x368] sm:$0xff]
    %v166 = vld [vmem:[#allocation5 + $0x370] sm:$0xff]
    %v167 = vld [vmem:[#allocation5 + $0x378] sm:$0xff]
    %v168 = vld [vmem:[#allocation5 + $0x380] sm:$0xff]
    %v169 = vld [vmem:[#allocation5 + $0x388] sm:$0xff]
    %v170 = vld [vmem:[#allocation5 + $0x390] sm:$0xff]
    %v171 = vld [vmem:[#allocation5 + $0x398] sm:$0xff]
    %v172 = vld [vmem:[#allocation5 + $0x3a0] sm:$0xff]
    %v173 = vld [vmem:[#allocation5 + $0x3a8] sm:$0xff]
    %v174 = vld [vmem:[#allocation5 + $0x3b0] sm:$0xff]
    %v175 = vld [vmem:[#allocation5 + $0x3b8] sm:$0xff]
    %v176 = vld [vmem:[#allocation5 + $0x3c0] sm:$0xff]
    %v177 = vld [vmem:[#allocation5 + $0x3c8] sm:$0xff]
    %v178 = vld [vmem:[#allocation5 + $0x3d0] sm:$0xff]
    %v179 = vld [vmem:[#allocation5 + $0x3d8] sm:$0xff]
    %v180 = vld [vmem:[#allocation5 + $0x3e0] sm:$0xff]
    %v181 = vld [vmem:[#allocation5 + $0x3e8] sm:$0xff]
    %v182 = vld [vmem:[#allocation5 + $0x3f0] sm:$0xff]
    %v183 = vld [vmem:[#allocation5 + $0x3f8] sm:$0xff]
    %v184 = vld [vmem:[#allocation5 + $0x400] sm:$0xff]
    %v185 = vld [vmem:[#allocation5 + $0x408] sm:$0xff]
    %v186 = vld [vmem:[#allocation5 + $0x410] sm:$0xff]
    %v187 = vld [vmem:[#allocation5 + $0x418] sm:$0xff]
    %v188 = vld [vmem:[#allocation5 + $0x420] sm:$0xff]
    %v189 = vld [vmem:[#allocation5 + $0x428] sm:$0xff]
    %v190 = vld [vmem:[#allocation5 + $0x430] sm:$0xff]
    %v191 = vld [vmem:[#allocation5 + $0x438] sm:$0xff]
    %v192 = vld [vmem:[#allocation5 + $0x440] sm:$0xff]
    %v193 = vld [vmem:[#allocation5 + $0x448] sm:$0xff]
    %v194 = vld [vmem:[#allocation5 + $0x450] sm:$0xff]
    %v195 = vld [vmem:[#allocation5 + $0x458] sm:$0xff]
    %v196 = vld [vmem:[#allocation5 + $0x460] sm:$0xff]
    %v197 = vld [vmem:[#allocation5 + $0x468] sm:$0xff]
    %v198 = vld [vmem:[#allocation5 + $0x470] sm:$0xff]
    %v199 = vld [vmem:[#allocation5 + $0x478] sm:$0xff]
    %v200 = vld [vmem:[#allocation5 + $0x480] sm:$0xff]
    %v201 = vld [vmem:[#allocation5 + $0x488] sm:$0xff]
    %v202 = vld [vmem:[#allocation5 + $0x490] sm:$0xff]
    %v203 = vld [vmem:[#allocation5 + $0x498] sm:$0xff]
    %v204 = vld [vmem:[#allocation5 + $0x4a0] sm:$0xff]
    %v205 = vld [vmem:[#allocation5 + $0x4a8] sm:$0xff]
    %v206 = vld [vmem:[#allocation5 + $0x4b0] sm:$0xff]
    %v207 = vld [vmem:[#allocation5 + $0x4b8] sm:$0xff]
    %v208 = vld [vmem:[#allocation5 + $0x4c0] sm:$0xff]
    %v209 = vld [vmem:[#allocation5 + $0x4c8] sm:$0xff]
    %v210 = vld [vmem:[#allocation5 + $0x4d0] sm:$0xff]
    %v211 = vld [vmem:[#allocation5 + $0x4d8] sm:$0xff]
    %v212 = vld [vmem:[#allocation5 + $0x4e0] sm:$0xff]
    %v213 = vld [vmem:[#allocation5 + $0x4e8] sm:$0xff]
    %v214 = vld [vmem:[#allocation5 + $0x4f0] sm:$0xff]
    %v215 = vld [vmem:[#allocation5 + $0x4f8] sm:$0xff]
    %v216 = vld [vmem:[#allocation5 + $0x500] sm:$0xff]
    %v217 = vld [vmem:[#allocation5 + $0x508] sm:$0xff]
    %v218 = vld [vmem:[#allocation5 + $0x510] sm:$0xff]
    %v219 = vld [vmem:[#allocation5 + $0x518] sm:$0xff]
    %v220 = vld [vmem:[#allocation5 + $0x520] sm:$0xff]
    %v221 = vld [vmem:[#allocation5 + $0x528] sm:$0xff]
    %v222 = vld [vmem:[#allocation5 + $0x530] sm:$0xff]
    %v223 = vld [vmem:[#allocation5 + $0x538] sm:$0xff]
    %v224 = vld [vmem:[#allocation5 + $0x540] sm:$0xff]
    %v225 = vld [vmem:[#allocation5 + $0x548] sm:$0xff]
    %v226 = vld [vmem:[#allocation5 + $0x550] sm:$0xff]
    %v227 = vld [vmem:[#allocation5 + $0x558] sm:$0xff]
    %v228 = vld [vmem:[#allocation5 + $0x560] sm:$0xff]
    %v229 = vld [vmem:[#allocation5 + $0x568] sm:$0xff]
    %v230 = vld [vmem:[#allocation5 + $0x570] sm:$0xff]
    %v231 = vld [vmem:[#allocation5 + $0x578] sm:$0xff]
    %v232 = vld [vmem:[#allocation5 + $0x580] sm:$0xff]
    %v233 = vld [vmem:[#allocation5 + $0x588] sm:$0xff]
    %v234 = vld [vmem:[#allocation5 + $0x590] sm:$0xff]
    %v235 = vld [vmem:[#allocation5 + $0x598] sm:$0xff]
    %v236 = vld [vmem:[#allocation5 + $0x5a0] sm:$0xff]
    %v237 = vld [vmem:[#allocation5 + $0x5a8] sm:$0xff]
    %v238 = vld [vmem:[#allocation5 + $0x5b0] sm:$0xff]
    %v239 = vld [vmem:[#allocation5 + $0x5b8] sm:$0xff]
    %v240 = vld [vmem:[#allocation5 + $0x5c0] sm:$0xff]
    %v241 = vld [vmem:[#allocation5 + $0x5c8] sm:$0xff]
    %v242 = vld [vmem:[#allocation5 + $0x5d0] sm:$0xff]
    %v243 = vld [vmem:[#allocation5 + $0x5d8] sm:$0xff]
    %v244 = vld [vmem:[#allocation5 + $0x5e0] sm:$0xff]
    %v245 = vld [vmem:[#allocation5 + $0x5e8] sm:$0xff]
    %v246 = vld [vmem:[#allocation5 + $0x5f0] sm:$0xff]
    %v247 = vld [vmem:[#allocation5 + $0x5f8] sm:$0xff]
    %v248 = vld [vmem:[#allocation5 + $0x600] sm:$0xff]
    %v249 = vld [vmem:[#allocation5 + $0x608] sm:$0xff]
    %v250 = vld [vmem:[#allocation5 + $0x610] sm:$0xff]
    %v251 = vld [vmem:[#allocation5 + $0x618] sm:$0xff]
    %v252 = vld [vmem:[#allocation5 + $0x620] sm:$0xff]
    %v253 = vld [vmem:[#allocation5 + $0x628] sm:$0xff]
    %v254 = vld [vmem:[#allocation5 + $0x630] sm:$0xff]
    %v255 = vld [vmem:[#allocation5 + $0x638] sm:$0xff]
    %v256 = vld [vmem:[#allocation5 + $0x640] sm:$0xff]
    %v257 = vld [vmem:[#allocation5 + $0x648] sm:$0xff]
    %v258 = vld [vmem:[#allocation5 + $0x650] sm:$0xff]
    %v259 = vld [vmem:[#allocation5 + $0x658] sm:$0xff]
    %v260 = vld [vmem:[#allocation5 + $0x660] sm:$0xff]
    %v261 = vld [vmem:[#allocation5 + $0x668] sm:$0xff]
    %v262 = vld [vmem:[#allocation5 + $0x670] sm:$0xff]
    %v263 = vld [vmem:[#allocation5 + $0x678] sm:$0xff]
    %v264 = vld [vmem:[#allocation5 + $0x680] sm:$0xff]
    %v265 = vld [vmem:[#allocation5 + $0x688] sm:$0xff]
    %v266 = vld [vmem:[#allocation5 + $0x690] sm:$0xff]
    %v267 = vld [vmem:[#allocation5 + $0x698] sm:$0xff]
    %v268 = vld [vmem:[#allocation5 + $0x6a0] sm:$0xff]
    %v269 = vld [vmem:[#allocation5 + $0x6a8] sm:$0xff]
    %v270 = vld [vmem:[#allocation5 + $0x6b0] sm:$0xff]
    %v271 = vld [vmem:[#allocation5 + $0x6b8] sm:$0xff]
    %v272 = vld [vmem:[#allocation5 + $0x6c0] sm:$0xff]
    %v273 = vld [vmem:[#allocation5 + $0x6c8] sm:$0xff]
    %v274 = vld [vmem:[#allocation5 + $0x6d0] sm:$0xff]
    %v275 = vld [vmem:[#allocation5 + $0x6d8] sm:$0xff]
    %v276 = vld [vmem:[#allocation5 + $0x6e0] sm:$0xff]
    %v277 = vld [vmem:[#allocation5 + $0x6e8] sm:$0xff]
    %v278 = vld [vmem:[#allocation5 + $0x6f0] sm:$0xff]
    %v279 = vld [vmem:[#allocation5 + $0x6f8] sm:$0xff]
    %v280 = vld [vmem:[#allocation5 + $0x700] sm:$0xff]
    %v281 = vld [vmem:[#allocation5 + $0x708] sm:$0xff]
    %v282 = vld [vmem:[#allocation5 + $0x710] sm:$0xff]
    %v283 = vld [vmem:[#allocation5 + $0x718] sm:$0xff]
    %v284 = vld [vmem:[#allocation5 + $0x720] sm:$0xff]
    %v285 = vld [vmem:[#allocation5 + $0x728] sm:$0xff]
    %v286 = vld [vmem:[#allocation5 + $0x730] sm:$0xff]
    %v287 = vld [vmem:[#allocation5 + $0x738] sm:$0xff]
    %v288 = vld [vmem:[#allocation5 + $0x740] sm:$0xff]
    %v289 = vld [vmem:[#allocation5 + $0x748] sm:$0xff]
    %v290 = vld [vmem:[#allocation5 + $0x750] sm:$0xff]
    %v291 = vld [vmem:[#allocation5 + $0x758] sm:$0xff]
    %v292 = vld [vmem:[#allocation5 + $0x760] sm:$0xff]
    %v293 = vld [vmem:[#allocation5 + $0x768] sm:$0xff]
    %v294 = vld [vmem:[#allocation5 + $0x770] sm:$0xff]
    %v295 = vld [vmem:[#allocation5 + $0x778] sm:$0xff]
    %v296 = vld [vmem:[#allocation5 + $0x780] sm:$0xff]
    %v297 = vld [vmem:[#allocation5 + $0x788] sm:$0xff]
    %v298 = vld [vmem:[#allocation5 + $0x790] sm:$0xff]
    %v299 = vld [vmem:[#allocation5 + $0x798] sm:$0xff]
    %v300 = vld [vmem:[#allocation5 + $0x7a0] sm:$0xff]
    %v301 = vld [vmem:[#allocation5 + $0x7a8] sm:$0xff]
    %v302 = vld [vmem:[#allocation5 + $0x7b0] sm:$0xff]
    %v303 = vld [vmem:[#allocation5 + $0x7b8] sm:$0xff]
    %v304 = vld [vmem:[#allocation5 + $0x7c0] sm:$0xff]
    %v305 = vld [vmem:[#allocation5 + $0x7c8] sm:$0xff]
    %v306 = vld [vmem:[#allocation5 + $0x7d0] sm:$0xff]
    %v307 = vld [vmem:[#allocation5 + $0x7d8] sm:$0xff]
    %v308 = vld [vmem:[#allocation5 + $0x7e0] sm:$0xff]
    %v309 = vld [vmem:[#allocation5 + $0x7e8] sm:$0xff]
    %v310 = vld [vmem:[#allocation5 + $0x7f0] sm:$0xff]
    %v311 = vld [vmem:[#allocation5 + $0x7f8] sm:$0xff]
    %v312 = vld [vmem:[#allocation5 + $0x800] sm:$0xff]
    %v313 = vld [vmem:[#allocation5 + $0x808] sm:$0xff]
    %v314 = vld [vmem:[#allocation5 + $0x810] sm:$0xff]
    %v315 = vld [vmem:[#allocation5 + $0x818] sm:$0xff]
    %v316 = vld [vmem:[#allocation5 + $0x820] sm:$0xff]
    %v317 = vld [vmem:[#allocation5 + $0x828] sm:$0xff]
    %v318 = vld [vmem:[#allocation5 + $0x830] sm:$0xff]
    %v319 = vld [vmem:[#allocation5 + $0x838] sm:$0xff]
    %v320 = vld [vmem:[#allocation5 + $0x840] sm:$0xff]
    %v321 = vld [vmem:[#allocation5 + $0x848] sm:$0xff]
    %v322 = vld [vmem:[#allocation5 + $0x850] sm:$0xff]
    %v323 = vld [vmem:[#allocation5 + $0x858] sm:$0xff]
    %v324 = vld [vmem:[#allocation5 + $0x860] sm:$0xff]
    %v325 = vld [vmem:[#allocation5 + $0x868] sm:$0xff]
    %v326 = vld [vmem:[#allocation5 + $0x870] sm:$0xff]
    %v327 = vld [vmem:[#allocation5 + $0x878] sm:$0xff]
    %v328 = vld [vmem:[#allocation5 + $0x880] sm:$0xff]
    %v329 = vld [vmem:[#allocation5 + $0x888] sm:$0xff]
    %v330 = vld [vmem:[#allocation5 + $0x890] sm:$0xff]
    %v331 = vld [vmem:[#allocation5 + $0x898] sm:$0xff]
    %v332 = vld [vmem:[#allocation5 + $0x8a0] sm:$0xff]
    %v333 = vld [vmem:[#allocation5 + $0x8a8] sm:$0xff]
    %v334 = vld [vmem:[#allocation5 + $0x8b0] sm:$0xff]
    %v335 = vld [vmem:[#allocation5 + $0x8b8] sm:$0xff]
    %v336 = vld [vmem:[#allocation5 + $0x8c0] sm:$0xff]
    %v337 = vld [vmem:[#allocation5 + $0x8c8] sm:$0xff]
    %v338 = vld [vmem:[#allocation5 + $0x8d0] sm:$0xff]
    %v339 = vld [vmem:[#allocation5 + $0x8d8] sm:$0xff]
    %v340 = vld [vmem:[#allocation5 + $0x8e0] sm:$0xff]
    %v341 = vld [vmem:[#allocation5 + $0x8e8] sm:$0xff]
    %v342 = vld [vmem:[#allocation5 + $0x8f0] sm:$0xff]
    %v343 = vld [vmem:[#allocation5 + $0x8f8] sm:$0xff]
    %v344 = vld [vmem:[#allocation5 + $0x900] sm:$0xff]
    %v345 = vld [vmem:[#allocation5 + $0x908] sm:$0xff]
    %v346 = vld [vmem:[#allocation5 + $0x910] sm:$0xff]
    %v347 = vld [vmem:[#allocation5 + $0x918] sm:$0xff]
    %v348 = vld [vmem:[#allocation5 + $0x920] sm:$0xff]
    %v349 = vld [vmem:[#allocation5 + $0x928] sm:$0xff]
    %v350 = vld [vmem:[#allocation5 + $0x930] sm:$0xff]
    %v351 = vld [vmem:[#allocation5 + $0x938] sm:$0xff]
    %v352 = vld [vmem:[#allocation5 + $0x940] sm:$0xff]
    %v353 = vld [vmem:[#allocation5 + $0x948] sm:$0xff]
    %v354 = vld [vmem:[#allocation5 + $0x950] sm:$0xff]
    %v355 = vld [vmem:[#allocation5 + $0x958] sm:$0xff]
    %v356 = vld [vmem:[#allocation5 + $0x960] sm:$0xff]
    %v357 = vld [vmem:[#allocation5 + $0x968] sm:$0xff]
    %v358 = vld [vmem:[#allocation5 + $0x970] sm:$0xff]
    %v359 = vld [vmem:[#allocation5 + $0x978] sm:$0xff]
    %v360 = vld [vmem:[#allocation5 + $0x980] sm:$0xff]
    %v361 = vld [vmem:[#allocation5 + $0x988] sm:$0xff]
    %v362 = vld [vmem:[#allocation5 + $0x990] sm:$0xff]
    %v363 = vld [vmem:[#allocation5 + $0x998] sm:$0xff]
    %v364 = vld [vmem:[#allocation5 + $0x9a0] sm:$0xff]
    %v365 = vld [vmem:[#allocation5 + $0x9a8] sm:$0xff]
    %v366 = vld [vmem:[#allocation5 + $0x9b0] sm:$0xff]
    %v367 = vld [vmem:[#allocation5 + $0x9b8] sm:$0xff]
    %v368 = vld [vmem:[#allocation5 + $0x9c0] sm:$0xff]
    %v369 = vld [vmem:[#allocation5 + $0x9c8] sm:$0xff]
    %v370 = vld [vmem:[#allocation5 + $0x9d0] sm:$0xff]
    %v371 = vld [vmem:[#allocation5 + $0x9d8] sm:$0xff]
    %v372 = vld [vmem:[#allocation5 + $0x9e0] sm:$0xff]
    %v373 = vld [vmem:[#allocation5 + $0x9e8] sm:$0xff]
    %v374 = vld [vmem:[#allocation5 + $0x9f0] sm:$0xff]
    %v375 = vld [vmem:[#allocation5 + $0x9f8] sm:$0xff]
    %v376 = vld [vmem:[#allocation5 + $0xa00] sm:$0xff]
    %v377 = vld [vmem:[#allocation5 + $0xa08] sm:$0xff]
    %v378 = vld [vmem:[#allocation5 + $0xa10] sm:$0xff]
    %v379 = vld [vmem:[#allocation5 + $0xa18] sm:$0xff]
    %v380 = vld [vmem:[#allocation5 + $0xa20] sm:$0xff]
    %v381 = vld [vmem:[#allocation5 + $0xa28] sm:$0xff]
    %v382 = vld [vmem:[#allocation5 + $0xa30] sm:$0xff]
    %v383 = vld [vmem:[#allocation5 + $0xa38] sm:$0xff]
    %v384 = vld [vmem:[#allocation5 + $0xa40] sm:$0xff]
    %v385 = vld [vmem:[#allocation5 + $0xa48] sm:$0xff]
    %v386 = vld [vmem:[#allocation5 + $0xa50] sm:$0xff]
    %v387 = vld [vmem:[#allocation5 + $0xa58] sm:$0xff]
    %v388 = vld [vmem:[#allocation5 + $0xa60] sm:$0xff]
    %v389 = vld [vmem:[#allocation5 + $0xa68] sm:$0xff]
    %v390 = vld [vmem:[#allocation5 + $0xa70] sm:$0xff]
    %v391 = vld [vmem:[#allocation5 + $0xa78] sm:$0xff]
    %v392 = vld [vmem:[#allocation5 + $0xa80] sm:$0xff]
    %v393 = vld [vmem:[#allocation5 + $0xa88] sm:$0xff]
    %v394 = vld [vmem:[#allocation5 + $0xa90] sm:$0xff]
    %v395 = vld [vmem:[#allocation5 + $0xa98] sm:$0xff]
    %v396 = vld [vmem:[#allocation5 + $0xaa0] sm:$0xff]
    %v397 = vld [vmem:[#allocation5 + $0xaa8] sm:$0xff]
    %v398 = vld [vmem:[#allocation5 + $0xab0] sm:$0xff]
    %v399 = vld [vmem:[#allocation5 + $0xab8] sm:$0xff]
    %v400 = vld [vmem:[#allocation5 + $0xac0] sm:$0xff]
    %v401 = vld [vmem:[#allocation5 + $0xac8] sm:$0xff]
    %v402 = vld [vmem:[#allocation5 + $0xad0] sm:$0xff]
    %v403 = vld [vmem:[#allocation5 + $0xad8] sm:$0xff]
    %v404 = vld [vmem:[#allocation5 + $0xae0] sm:$0xff]
    %v405 = vld [vmem:[#allocation5 + $0xae8] sm:$0xff]
    %v406 = vld [vmem:[#allocation5 + $0xaf0] sm:$0xff]
    %v407 = vld [vmem:[#allocation5 + $0xaf8] sm:$0xff]
    %v408 = vld [vmem:[#allocation5 + $0xb00] sm:$0xff]
    %v409 = vld [vmem:[#allocation5 + $0xb08] sm:$0xff]
    %v410 = vld [vmem:[#allocation5 + $0xb10] sm:$0xff]
    %v411 = vld [vmem:[#allocation5 + $0xb18] sm:$0xff]
    %v412 = vld [vmem:[#allocation5 + $0xb20] sm:$0xff]
    %v413 = vld [vmem:[#allocation5 + $0xb28] sm:$0xff]
    %v414 = vld [vmem:[#allocation5 + $0xb30] sm:$0xff]
    %v415 = vld [vmem:[#allocation5 + $0xb38] sm:$0xff]
    %v416 = vld [vmem:[#allocation5 + $0xb40] sm:$0xff]
    %v417 = vld [vmem:[#allocation5 + $0xb48] sm:$0xff]
    %v418 = vld [vmem:[#allocation5 + $0xb50] sm:$0xff]
    %v419 = vld [vmem:[#allocation5 + $0xb58] sm:$0xff]
    %v420 = vld [vmem:[#allocation5 + $0xb60] sm:$0xff]
    %v421 = vld [vmem:[#allocation5 + $0xb68] sm:$0xff]
    %v422 = vld [vmem:[#allocation5 + $0xb70] sm:$0xff]
    %v423 = vld [vmem:[#allocation5 + $0xb78] sm:$0xff]
    %v424 = vld [vmem:[#allocation5 + $0xb80] sm:$0xff]
    %v425 = vld [vmem:[#allocation5 + $0xb88] sm:$0xff]
    %v426 = vld [vmem:[#allocation5 + $0xb90] sm:$0xff]
    %v427 = vld [vmem:[#allocation5 + $0xb98] sm:$0xff]
    %v428 = vld [vmem:[#allocation5 + $0xba0] sm:$0xff]
    %v429 = vld [vmem:[#allocation5 + $0xba8] sm:$0xff]
    %v430 = vld [vmem:[#allocation5 + $0xbb0] sm:$0xff]
    %v431 = vld [vmem:[#allocation5 + $0xbb8] sm:$0xff]
    %v432 = vld [vmem:[#allocation5 + $0xbc0] sm:$0xff]
    %v433 = vld [vmem:[#allocation5 + $0xbc8] sm:$0xff]
    %v434 = vld [vmem:[#allocation5 + $0xbd0] sm:$0xff]
    %v435 = vld [vmem:[#allocation5 + $0xbd8] sm:$0xff]
    %v436 = vld [vmem:[#allocation5 + $0xbe0] sm:$0xff]
    %v437 = vld [vmem:[#allocation5 + $0xbe8] sm:$0xff]
    %v438 = vld [vmem:[#allocation5 + $0xbf0] sm:$0xff]
    %v439 = vld [vmem:[#allocation5 + $0xbf8] sm:$0xff]
    %v440 = vld [vmem:[#allocation5 + $0xc00] sm:$0xff]
    %v441 = vld [vmem:[#allocation5 + $0xc08] sm:$0xff]
    %v442 = vld [vmem:[#allocation5 + $0xc10] sm:$0xff]
    %v443 = vld [vmem:[#allocation5 + $0xc18] sm:$0xff]
    %v444 = vld [vmem:[#allocation5 + $0xc20] sm:$0xff]
    %v445 = vld [vmem:[#allocation5 + $0xc28] sm:$0xff]
    %v446 = vld [vmem:[#allocation5 + $0xc30] sm:$0xff]
    %v447 = vld [vmem:[#allocation5 + $0xc38] sm:$0xff]
    %v448 = vld [vmem:[#allocation5 + $0xc40] sm:$0xff]
    %v449 = vld [vmem:[#allocation5 + $0xc48] sm:$0xff]
    %v450 = vld [vmem:[#allocation5 + $0xc50] sm:$0xff]
    %v451 = vld [vmem:[#allocation5 + $0xc58] sm:$0xff]
    %v452 = vld [vmem:[#allocation5 + $0xc60] sm:$0xff]
    %v453 = vld [vmem:[#allocation5 + $0xc68] sm:$0xff]
    %v454 = vld [vmem:[#allocation5 + $0xc70] sm:$0xff]
    %v455 = vld [vmem:[#allocation5 + $0xc78] sm:$0xff]
    %v456 = vld [vmem:[#allocation5 + $0xc80] sm:$0xff]
    %v457 = vld [vmem:[#allocation5 + $0xc88] sm:$0xff]
    %v458 = vld [vmem:[#allocation5 + $0xc90] sm:$0xff]
    %v459 = vld [vmem:[#allocation5 + $0xc98] sm:$0xff]
    %v460 = vld [vmem:[#allocation5 + $0xca0] sm:$0xff]
    %v461 = vld [vmem:[#allocation5 + $0xca8] sm:$0xff]
    %v462 = vld [vmem:[#allocation5 + $0xcb0] sm:$0xff]
    %v463 = vld [vmem:[#allocation5 + $0xcb8] sm:$0xff]
    %v464 = vld [vmem:[#allocation5 + $0xcc0] sm:$0xff]
    %v465 = vld [vmem:[#allocation5 + $0xcc8] sm:$0xff]
    %v466 = vld [vmem:[#allocation5 + $0xcd0] sm:$0xff]
    %v467 = vld [vmem:[#allocation5 + $0xcd8] sm:$0xff]
    %v468 = vld [vmem:[#allocation5 + $0xce0] sm:$0xff]
    %v469 = vld [vmem:[#allocation5 + $0xce8] sm:$0xff]
    %v470 = vld [vmem:[#allocation5 + $0xcf0] sm:$0xff]
    %v471 = vld [vmem:[#allocation5 + $0xcf8] sm:$0xff]
    %v472 = vld [vmem:[#allocation5 + $0xd00] sm:$0xff]
    %v473 = vld [vmem:[#allocation5 + $0xd08] sm:$0xff]
    %v474 = vld [vmem:[#allocation5 + $0xd10] sm:$0xff]
    %v475 = vld [vmem:[#allocation5 + $0xd18] sm:$0xff]
    %v476 = vld [vmem:[#allocation5 + $0xd20] sm:$0xff]
    %v477 = vld [vmem:[#allocation5 + $0xd28] sm:$0xff]
    %v478 = vld [vmem:[#allocation5 + $0xd30] sm:$0xff]
    %v479 = vld [vmem:[#allocation5 + $0xd38] sm:$0xff]
    %v480 = vld [vmem:[#allocation5 + $0xd40] sm:$0xff]
    %v481 = vld [vmem:[#allocation5 + $0xd48] sm:$0xff]
    %v482 = vld [vmem:[#allocation5 + $0xd50] sm:$0xff]
    %v483 = vld [vmem:[#allocation5 + $0xd58] sm:$0xff]
    %v484 = vld [vmem:[#allocation5 + $0xd60] sm:$0xff]
    %v485 = vld [vmem:[#allocation5 + $0xd68] sm:$0xff]
    %v486 = vld [vmem:[#allocation5 + $0xd70] sm:$0xff]
    %v487 = vld [vmem:[#allocation5 + $0xd78] sm:$0xff]
    %v488 = vld [vmem:[#allocation5 + $0xd80] sm:$0xff]
    %v489 = vld [vmem:[#allocation5 + $0xd88] sm:$0xff]
    %v490 = vld [vmem:[#allocation5 + $0xd90] sm:$0xff]
    %v491 = vld [vmem:[#allocation5 + $0xd98] sm:$0xff]
    %v492 = vld [vmem:[#allocation5 + $0xda0] sm:$0xff]
    %v493 = vld [vmem:[#allocation5 + $0xda8] sm:$0xff]
    %v494 = vld [vmem:[#allocation5 + $0xdb0] sm:$0xff]
    %v495 = vld [vmem:[#allocation5 + $0xdb8] sm:$0xff]
    %v496 = vld [vmem:[#allocation5 + $0xdc0] sm:$0xff]
    %v497 = vld [vmem:[#allocation5 + $0xdc8] sm:$0xff]
    %v498 = vld [vmem:[#allocation5 + $0xdd0] sm:$0xff]
    %v499 = vld [vmem:[#allocation5 + $0xdd8] sm:$0xff]
    %v500 = vld [vmem:[#allocation5 + $0xde0] sm:$0xff]
    %v501 = vld [vmem:[#allocation5 + $0xde8] sm:$0xff]
    %v502 = vld [vmem:[#allocation5 + $0xdf0] sm:$0xff]
    %v503 = vld [vmem:[#allocation5 + $0xdf8] sm:$0xff]
    %v504 = vld [vmem:[#allocation5 + $0xe00] sm:$0xff]
    %v505 = vld [vmem:[#allocation5 + $0xe08] sm:$0xff]
    %v506 = vld [vmem:[#allocation5 + $0xe10] sm:$0xff]
    %v507 = vld [vmem:[#allocation5 + $0xe18] sm:$0xff]
    %v508 = vld [vmem:[#allocation5 + $0xe20] sm:$0xff]
    %v509 = vld [vmem:[#allocation5 + $0xe28] sm:$0xff]
    %v510 = vld [vmem:[#allocation5 + $0xe30] sm:$0xff]
    %v511 = vld [vmem:[#allocation5 + $0xe38] sm:$0xff]
    %v512 = vld [vmem:[#allocation5 + $0xe40] sm:$0xff]
    %v513 = vld [vmem:[#allocation5 + $0xe48] sm:$0xff]
    %v514 = vld [vmem:[#allocation5 + $0xe50] sm:$0xff]
    %v515 = vld [vmem:[#allocation5 + $0xe58] sm:$0xff]
    %v516 = vld [vmem:[#allocation5 + $0xe60] sm:$0xff]
    %v517 = vld [vmem:[#allocation5 + $0xe68] sm:$0xff]
    %v518 = vld [vmem:[#allocation5 + $0xe70] sm:$0xff]
    %v519 = vld [vmem:[#allocation5 + $0xe78] sm:$0xff]
    %v520 = vld [vmem:[#allocation5 + $0xe80] sm:$0xff]
    %v521 = vld [vmem:[#allocation5 + $0xe88] sm:$0xff]
    %v522 = vld [vmem:[#allocation5 + $0xe90] sm:$0xff]
    %v523 = vld [vmem:[#allocation5 + $0xe98] sm:$0xff]
    %v524 = vld [vmem:[#allocation5 + $0xea0] sm:$0xff]
    %v525 = vld [vmem:[#allocation5 + $0xea8] sm:$0xff]
    %v526 = vld [vmem:[#allocation5 + $0xeb0] sm:$0xff]
    %v527 = vld [vmem:[#allocation5 + $0xeb8] sm:$0xff]
    %v528 = vld [vmem:[#allocation5 + $0xec0] sm:$0xff]
    %v529 = vld [vmem:[#allocation5 + $0xec8] sm:$0xff]
    %v530 = vld [vmem:[#allocation5 + $0xed0] sm:$0xff]
    %v531 = vld [vmem:[#allocation5 + $0xed8] sm:$0xff]
    %v532 = vld [vmem:[#allocation5 + $0xee0] sm:$0xff]
    %v533 = vld [vmem:[#allocation5 + $0xee8] sm:$0xff]
    %v534 = vld [vmem:[#allocation5 + $0xef0] sm:$0xff]
    %v535 = vld [vmem:[#allocation5 + $0xef8] sm:$0xff]
    %v536 = vld [vmem:[#allocation5 + $0xf00] sm:$0xff]
    %v537 = vld [vmem:[#allocation5 + $0xf08] sm:$0xff]
    %v538 = vld [vmem:[#allocation5 + $0xf10] sm:$0xff]
    %v539 = vld [vmem:[#allocation5 + $0xf18] sm:$0xff]
    %v540 = vld [vmem:[#allocation5 + $0xf20] sm:$0xff]
    %v541 = vld [vmem:[#allocation5 + $0xf28] sm:$0xff]
    %v542 = vld [vmem:[#allocation5 + $0xf30] sm:$0xff]
    %v543 = vld [vmem:[#allocation5 + $0xf38] sm:$0xff]
    %v544 = vld [vmem:[#allocation5 + $0xf40] sm:$0xff]
    %v545 = vld [vmem:[#allocation5 + $0xf48] sm:$0xff]
    %v546 = vld [vmem:[#allocation5 + $0xf50] sm:$0xff]
    %v547 = vld [vmem:[#allocation5 + $0xf58] sm:$0xff]
    %v548 = vld [vmem:[#allocation5 + $0xf60] sm:$0xff]
    %v549 = vld [vmem:[#allocation5 + $0xf68] sm:$0xff]
    %v550 = vld [vmem:[#allocation5 + $0xf70] sm:$0xff]
    %v551 = vld [vmem:[#allocation5 + $0xf78] sm:$0xff]
    %v552 = vld [vmem:[#allocation5 + $0xf80] sm:$0xff]
    %v553 = vld [vmem:[#allocation5 + $0xf88] sm:$0xff]
    %v554 = vld [vmem:[#allocation5 + $0xf90] sm:$0xff]
    %v555 = vld [vmem:[#allocation5 + $0xf98] sm:$0xff]
    %v556 = vld [vmem:[#allocation5 + $0xfa0] sm:$0xff]
    %v557 = vld [vmem:[#allocation5 + $0xfa8] sm:$0xff]
    %v558 = vld [vmem:[#allocation5 + $0xfb0] sm:$0xff]
    %v559 = vld [vmem:[#allocation5 + $0xfb8] sm:$0xff]
    %v560 = vld [vmem:[#allocation5 + $0xfc0] sm:$0xff]
    %v561 = vld [vmem:[#allocation5 + $0xfc8] sm:$0xff]
    %v562 = vld [vmem:[#allocation5 + $0xfd0] sm:$0xff]
    %v563 = vld [vmem:[#allocation5 + $0xfd8] sm:$0xff]
    %v564 = vld [vmem:[#allocation5 + $0xfe0] sm:$0xff]
    %v565 = vld [vmem:[#allocation5 + $0xfe8] sm:$0xff]
    %v566 = vld [vmem:[#allocation5 + $0xff0] sm:$0xff]
    %v567 = vld [vmem:[#allocation5 + $0xff8] sm:$0xff]
    %v568 = vld [vmem:[#allocation7] sm:$0xff]
    %v570 = vlaneseq
    %v571 = vshrl.u32 %v570, 7
    %v572 = vsub.s32 0, %v571
    %v573 = vrot.slane %v568, %v572
    %v574 = vlaneseq
    %v575 = vshrl.u32 %v574, 7
    %v576 = vsub.s32 1, %v575
    %v577 = vrot.slane %v568, %v576
    %v578 = vlaneseq
    %v579 = vshrl.u32 %v578, 7
    %v580 = vsub.s32 2, %v579
    %v581 = vrot.slane %v568, %v580
    %v582 = vlaneseq
    %v583 = vshrl.u32 %v582, 7
    %v584 = vsub.s32 3, %v583
    %v585 = vrot.slane %v568, %v584
    %v586 = vlaneseq
    %v587 = vshrl.u32 %v586, 7
    %v588 = vsub.s32 4, %v587
    %v589 = vrot.slane %v568, %v588
    %v590 = vlaneseq
    %v591 = vshrl.u32 %v590, 7
    %v592 = vsub.s32 5, %v591
    %v593 = vrot.slane %v568, %v592
    %v594 = vlaneseq
    %v595 = vshrl.u32 %v594, 7
    %v596 = vsub.s32 6, %v595
    %v597 = vrot.slane %v568, %v596
    %v598 = vlaneseq
    %v599 = vshrl.u32 %v598, 7
    %v600 = vsub.s32 7, %v599
    %v601 = vrot.slane %v568, %v600
    %610 = vmatprep.subr.mxu0 %v57
    %611 = vmatpush1.msra.mxu0 %v56
    %612 = vmatprep.subr.mxu0 %v65
    %613 = vmatpush1.msra.mxu0 %v64
    %614 = vmatprep.subr.mxu0 %v73
    %615 = vmatpush1.msra.mxu0 %v72
    %616 = vmatprep.subr.mxu0 %v81
    %617 = vmatpush1.msra.mxu0 %v80
    %618 = vmatprep.subr.mxu0 %v89
    %619 = vmatpush1.msra.mxu0 %v88
    %620 = vmatprep.subr.mxu0 %v97
    %621 = vmatpush1.msra.mxu0 %v96
    %622 = vmatprep.subr.mxu0 %v105
    %623 = vmatpush1.msra.mxu0 %v104
    %624 = vmatprep.subr.mxu0 %v113
    %625 = vmatpush1.msra.mxu0 %v112
    %626 = vmatprep.subr.mxu0 %v121
    %627 = vmatpush1.msra.mxu0 %v120
    %628 = vmatprep.subr.mxu0 %v129
    %629 = vmatpush1.msra.mxu0 %v128
    %630 = vmatprep.subr.mxu0 %v137
    %631 = vmatpush1.msra.mxu0 %v136
    %632 = vmatprep.subr.mxu0 %v145
    %633 = vmatpush1.msra.mxu0 %v144
    %634 = vmatprep.subr.mxu0 %v153
    %635 = vmatpush1.msra.mxu0 %v152
    %636 = vmatprep.subr.mxu0 %v161
    %637 = vmatpush1.msra.mxu0 %v160
    %638 = vmatprep.subr.mxu0 %v169
    %639 = vmatpush1.msra.mxu0 %v168
    %640 = vmatprep.subr.mxu0 %v177
    %641 = vmatpush1.msra.mxu0 %v176
    %642 = vmatprep.subr.mxu0 %v185
    %643 = vmatpush1.msra.mxu0 %v184
    %644 = vmatprep.subr.mxu0 %v193
    %645 = vmatpush1.msra.mxu0 %v192
    %646 = vmatprep.subr.mxu0 %v201
    %647 = vmatpush1.msra.mxu0 %v200
    %648 = vmatprep.subr.mxu0 %v209
    %649 = vmatpush1.msra.mxu0 %v208
    %650 = vmatprep.subr.mxu0 %v217
    %651 = vmatpush1.msra.mxu0 %v216
    %652 = vmatprep.subr.mxu0 %v225
    %653 = vmatpush1.msra.mxu0 %v224
    %654 = vmatprep.subr.mxu0 %v233
    %655 = vmatpush1.msra.mxu0 %v232
    %656 = vmatprep.subr.mxu0 %v241
    %657 = vmatpush1.msra.mxu0 %v240
    %658 = vmatprep.subr.mxu0 %v249
    %659 = vmatpush1.msra.mxu0 %v248
    %660 = vmatprep.subr.mxu0 %v257
    %661 = vmatpush1.msra.mxu0 %v256
    %662 = vmatprep.subr.mxu0 %v265
    %663 = vmatpush1.msra.mxu0 %v264
    %664 = vmatprep.subr.mxu0 %v273
    %665 = vmatpush1.msra.mxu0 %v272
    %666 = vmatprep.subr.mxu0 %v281
    %667 = vmatpush1.msra.mxu0 %v280
    %668 = vmatprep.subr.mxu0 %v289
    %669 = vmatpush1.msra.mxu0 %v288
    %670 = vmatprep.subr.mxu0 %v297
    %671 = vmatpush1.msra.mxu0 %v296
    %672 = vmatprep.subr.mxu0 %v305
    %673 = vmatpush1.msra.mxu0 %v304
    %674 = vmatprep.mubr.f32.mxu0 %v53
    %675 = vmatmul.mubr.f32.gmra.mrb[0].mxu0 %v52
    %v676 = vpop.f32.mrb[0].mxu0
    %v677 = vadd.f32 %v573, %v676
    %v678 = vpop.f32.mrb[0].mxu0
    %v679 = vadd.f32 %v577, %v678
    %680 = vdwg.mxu0
    %681 = vmatprep.subr.mxu0 %v313
    %682 = vmatpush1.msra.mxu0 %v312
    %683 = vmatprep.subr.mxu0 %v321
    %684 = vmatpush1.msra.mxu0 %v320
    %685 = vmatprep.subr.mxu0 %v329
    %686 = vmatpush1.msra.mxu0 %v328
    %687 = vmatprep.subr.mxu0 %v337
    %688 = vmatpush1.msra.mxu0 %v336
    %689 = vmatprep.subr.mxu0 %v345
    %690 = vmatpush1.msra.mxu0 %v344
    %691 = vmatprep.subr.mxu0 %v353
    %692 = vmatpush1.msra.mxu0 %v352
    %693 = vmatprep.subr.mxu0 %v361
    %694 = vmatpush1.msra.mxu0 %v360
    %695 = vmatprep.subr.mxu0 %v369
    %696 = vmatpush1.msra.mxu0 %v368
    %697 = vmatprep.subr.mxu0 %v377
    %698 = vmatpush1.msra.mxu0 %v376
    %699 = vmatprep.subr.mxu0 %v385
    %700 = vmatpush1.msra.mxu0 %v384
    %701 = vmatprep.subr.mxu0 %v393
    %702 = vmatpush1.msra.mxu0 %v392
    %703 = vmatprep.subr.mxu0 %v401
    %704 = vmatpush1.msra.mxu0 %v400
    %705 = vmatprep.subr.mxu0 %v409
    %706 = vmatpush1.msra.mxu0 %v408
    %707 = vmatprep.subr.mxu0 %v417
    %708 = vmatpush1.msra.mxu0 %v416
    %709 = vmatprep.subr.mxu0 %v425
    %710 = vmatpush1.msra.mxu0 %v424
    %711 = vmatprep.subr.mxu0 %v433
    %712 = vmatpush1.msra.mxu0 %v432
    %713 = vmatprep.subr.mxu0 %v441
    %714 = vmatpush1.msra.mxu0 %v440
    %715 = vmatprep.subr.mxu0 %v449
    %716 = vmatpush1.msra.mxu0 %v448
    %717 = vmatprep.subr.mxu0 %v457
    %718 = vmatpush1.msra.mxu0 %v456
    %719 = vmatprep.subr.mxu0 %v465
    %720 = vmatpush1.msra.mxu0 %v464
    %721 = vmatprep.subr.mxu0 %v473
    %722 = vmatpush1.msra.mxu0 %v472
    %723 = vmatprep.subr.mxu0 %v481
    %724 = vmatpush1.msra.mxu0 %v480
    %725 = vmatprep.subr.mxu0 %v489
    %726 = vmatpush1.msra.mxu0 %v488
    %727 = vmatprep.subr.mxu0 %v497
    %728 = vmatpush1.msra.mxu0 %v496
    %729 = vmatprep.subr.mxu0 %v505
    %730 = vmatpush1.msra.mxu0 %v504
    %731 = vmatprep.subr.mxu0 %v513
    %732 = vmatpush1.msra.mxu0 %v512
    %733 = vmatprep.subr.mxu0 %v521
    %734 = vmatpush1.msra.mxu0 %v520
    %735 = vmatprep.subr.mxu0 %v529
    %736 = vmatpush1.msra.mxu0 %v528
    %737 = vmatprep.subr.mxu0 %v537
    %738 = vmatpush1.msra.mxu0 %v536
    %739 = vmatprep.subr.mxu0 %v545
    %740 = vmatpush1.msra.mxu0 %v544
    %741 = vmatprep.subr.mxu0 %v553
    %742 = vmatpush1.msra.mxu0 %v552
    %743 = vmatprep.subr.mxu0 %v561
    %744 = vmatpush1.msra.mxu0 %v560
    %745 = vmatprep.mubr.f32.mxu0 %v55
    %746 = vmatmul.mubr.f32.gmra.mrb[0].mxu0 %v54
    %v747 = vpop.f32.mrb[0].mxu0
    %v748 = vadd.f32 %v677, %v747
    %v749 = vpop.f32.mrb[0].mxu0
    %v750 = vadd.f32 %v679, %v749
    %751 = vdwg.mxu0
    %752 = vmatprep.subr.mxu0 %v59
    %753 = vmatpush1.msra.mxu0 %v58
    %754 = vmatprep.subr.mxu0 %v67
    %755 = vmatpush1.msra.mxu0 %v66
    %756 = vmatprep.subr.mxu0 %v75
    %757 = vmatpush1.msra.mxu0 %v74
    %758 = vmatprep.subr.mxu0 %v83
    %759 = vmatpush1.msra.mxu0 %v82
    %760 = vmatprep.subr.mxu0 %v91
    %761 = vmatpush1.msra.mxu0 %v90
    %762 = vmatprep.subr.mxu0 %v99
    %763 = vmatpush1.msra.mxu0 %v98
    %764 = vmatprep.subr.mxu0 %v107
    %765 = vmatpush1.msra.mxu0 %v106
    %766 = vmatprep.subr.mxu0 %v115
    %767 = vmatpush1.msra.mxu0 %v114
    %768 = vmatprep.subr.mxu0 %v123
    %769 = vmatpush1.msra.mxu0 %v122
    %770 = vmatprep.subr.mxu0 %v131
    %771 = vmatpush1.msra.mxu0 %v130
    %772 = vmatprep.subr.mxu0 %v139
    %773 = vmatpush1.msra.mxu0 %v138
    %774 = vmatprep.subr.mxu0 %v147
    %775 = vmatpush1.msra.mxu0 %v146
    %776 = vmatprep.subr.mxu0 %v155
    %777 = vmatpush1.msra.mxu0 %v154
    %778 = vmatprep.subr.mxu0 %v163
    %779 = vmatpush1.msra.mxu0 %v162
    %780 = vmatprep.subr.mxu0 %v171
    %781 = vmatpush1.msra.mxu0 %v170
    %782 = vmatprep.subr.mxu0 %v179
    %783 = vmatpush1.msra.mxu0 %v178
    %784 = vmatprep.subr.mxu0 %v187
    %785 = vmatpush1.msra.mxu0 %v186
    %786 = vmatprep.subr.mxu0 %v195
    %787 = vmatpush1.msra.mxu0 %v194
    %788 = vmatprep.subr.mxu0 %v203
    %789 = vmatpush1.msra.mxu0 %v202
    %790 = vmatprep.subr.mxu0 %v211
    %791 = vmatpush1.msra.mxu0 %v210
    %792 = vmatprep.subr.mxu0 %v219
    %793 = vmatpush1.msra.mxu0 %v218
    %794 = vmatprep.subr.mxu0 %v227
    %795 = vmatpush1.msra.mxu0 %v226
    %796 = vmatprep.subr.mxu0 %v235
    %797 = vmatpush1.msra.mxu0 %v234
    %798 = vmatprep.subr.mxu0 %v243
    %799 = vmatpush1.msra.mxu0 %v242
    %800 = vmatprep.subr.mxu0 %v251
    %801 = vmatpush1.msra.mxu0 %v250
    %802 = vmatprep.subr.mxu0 %v259
    %803 = vmatpush1.msra.mxu0 %v258
    %804 = vmatprep.subr.mxu0 %v267
    %805 = vmatpush1.msra.mxu0 %v266
    %806 = vmatprep.subr.mxu0 %v275
    %807 = vmatpush1.msra.mxu0 %v274
    %808 = vmatprep.subr.mxu0 %v283
    %809 = vmatpush1.msra.mxu0 %v282
    %810 = vmatprep.subr.mxu0 %v291
    %811 = vmatpush1.msra.mxu0 %v290
    %812 = vmatprep.subr.mxu0 %v299
    %813 = vmatpush1.msra.mxu0 %v298
    %814 = vmatprep.subr.mxu0 %v307
    %815 = vmatpush1.msra.mxu0 %v306
    %816 = vmatprep.mubr.f32.mxu0 %v53
    %817 = vmatmul.mubr.f32.gmra.mrb[0].mxu0 %v52
    %v818 = vpop.f32.mrb[0].mxu0
    %v819 = vadd.f32 %v581, %v818
    %v820 = vpop.f32.mrb[0].mxu0
    %v821 = vadd.f32 %v585, %v820
    %822 = vdwg.mxu0
    %823 = vmatprep.subr.mxu0 %v315
    %824 = vmatpush1.msra.mxu0 %v314
    %825 = vmatprep.subr.mxu0 %v323
    %826 = vmatpush1.msra.mxu0 %v322
    %827 = vmatprep.subr.mxu0 %v331
    %828 = vmatpush1.msra.mxu0 %v330
    %829 = vmatprep.subr.mxu0 %v339
    %830 = vmatpush1.msra.mxu0 %v338
    %831 = vmatprep.subr.mxu0 %v347
    %832 = vmatpush1.msra.mxu0 %v346
    %833 = vmatprep.subr.mxu0 %v355
    %834 = vmatpush1.msra.mxu0 %v354
    %835 = vmatprep.subr.mxu0 %v363
    %836 = vmatpush1.msra.mxu0 %v362
    %837 = vmatprep.subr.mxu0 %v371
    %838 = vmatpush1.msra.mxu0 %v370
    %839 = vmatprep.subr.mxu0 %v379
    %840 = vmatpush1.msra.mxu0 %v378
    %841 = vmatprep.subr.mxu0 %v387
    %842 = vmatpush1.msra.mxu0 %v386
    %843 = vmatprep.subr.mxu0 %v395
    %844 = vmatpush1.msra.mxu0 %v394
    %845 = vmatprep.subr.mxu0 %v403
    %846 = vmatpush1.msra.mxu0 %v402
    %847 = vmatprep.subr.mxu0 %v411
    %848 = vmatpush1.msra.mxu0 %v410
    %849 = vmatprep.subr.mxu0 %v419
    %850 = vmatpush1.msra.mxu0 %v418
    %851 = vmatprep.subr.mxu0 %v427
    %852 = vmatpush1.msra.mxu0 %v426
    %853 = vmatprep.subr.mxu0 %v435
    %854 = vmatpush1.msra.mxu0 %v434
    %855 = vmatprep.subr.mxu0 %v443
    %856 = vmatpush1.msra.mxu0 %v442
    %857 = vmatprep.subr.mxu0 %v451
    %858 = vmatpush1.msra.mxu0 %v450
    %859 = vmatprep.subr.mxu0 %v459
    %860 = vmatpush1.msra.mxu0 %v458
    %861 = vmatprep.subr.mxu0 %v467
    %862 = vmatpush1.msra.mxu0 %v466
    %863 = vmatprep.subr.mxu0 %v475
    %864 = vmatpush1.msra.mxu0 %v474
    %865 = vmatprep.subr.mxu0 %v483
    %866 = vmatpush1.msra.mxu0 %v482
    %867 = vmatprep.subr.mxu0 %v491
    %868 = vmatpush1.msra.mxu0 %v490
    %869 = vmatprep.subr.mxu0 %v499
    %870 = vmatpush1.msra.mxu0 %v498
    %871 = vmatprep.subr.mxu0 %v507
    %872 = vmatpush1.msra.mxu0 %v506
    %873 = vmatprep.subr.mxu0 %v515
    %874 = vmatpush1.msra.mxu0 %v514
    %875 = vmatprep.subr.mxu0 %v523
    %876 = vmatpush1.msra.mxu0 %v522
    %877 = vmatprep.subr.mxu0 %v531
    %878 = vmatpush1.msra.mxu0 %v530
    %879 = vmatprep.subr.mxu0 %v539
    %880 = vmatpush1.msra.mxu0 %v538
    %881 = vmatprep.subr.mxu0 %v547
    %882 = vmatpush1.msra.mxu0 %v546
    %883 = vmatprep.subr.mxu0 %v555
    %884 = vmatpush1.msra.mxu0 %v554
    %885 = vmatprep.subr.mxu0 %v563
    %886 = vmatpush1.msra.mxu0 %v562
    %887 = vmatprep.mubr.f32.mxu0 %v55
    %888 = vmatmul.mubr.f32.gmra.mrb[0].mxu0 %v54
    %v889 = vpop.f32.mrb[0].mxu0
    %v890 = vadd.f32 %v819, %v889
    %v891 = vpop.f32.mrb[0].mxu0
    %v892 = vadd.f32 %v821, %v891
    %893 = vdwg.mxu0
    %894 = vmatprep.subr.mxu0 %v61
    %895 = vmatpush1.msra.mxu0 %v60
    %896 = vmatprep.subr.mxu0 %v69
    %897 = vmatpush1.msra.mxu0 %v68
    %898 = vmatprep.subr.mxu0 %v77
    %899 = vmatpush1.msra.mxu0 %v76
    %900 = vmatprep.subr.mxu0 %v85
    %901 = vmatpush1.msra.mxu0 %v84
    %902 = vmatprep.subr.mxu0 %v93
    %903 = vmatpush1.msra.mxu0 %v92
    %904 = vmatprep.subr.mxu0 %v101
    %905 = vmatpush1.msra.mxu0 %v100
    %906 = vmatprep.subr.mxu0 %v109
    %907 = vmatpush1.msra.mxu0 %v108
    %908 = vmatprep.subr.mxu0 %v117
    %909 = vmatpush1.msra.mxu0 %v116
    %910 = vmatprep.subr.mxu0 %v125
    %911 = vmatpush1.msra.mxu0 %v124
    %912 = vmatprep.subr.mxu0 %v133
    %913 = vmatpush1.msra.mxu0 %v132
    %914 = vmatprep.subr.mxu0 %v141
    %915 = vmatpush1.msra.mxu0 %v140
    %916 = vmatprep.subr.mxu0 %v149
    %917 = vmatpush1.msra.mxu0 %v148
    %918 = vmatprep.subr.mxu0 %v157
    %919 = vmatpush1.msra.mxu0 %v156
    %920 = vmatprep.subr.mxu0 %v165
    %921 = vmatpush1.msra.mxu0 %v164
    %922 = vmatprep.subr.mxu0 %v173
    %923 = vmatpush1.msra.mxu0 %v172
    %924 = vmatprep.subr.mxu0 %v181
    %925 = vmatpush1.msra.mxu0 %v180
    %926 = vmatprep.subr.mxu0 %v189
    %927 = vmatpush1.msra.mxu0 %v188
    %928 = vmatprep.subr.mxu0 %v197
    %929 = vmatpush1.msra.mxu0 %v196
    %930 = vmatprep.subr.mxu0 %v205
    %931 = vmatpush1.msra.mxu0 %v204
    %932 = vmatprep.subr.mxu0 %v213
    %933 = vmatpush1.msra.mxu0 %v212
    %934 = vmatprep.subr.mxu0 %v221
    %935 = vmatpush1.msra.mxu0 %v220
    %936 = vmatprep.subr.mxu0 %v229
    %937 = vmatpush1.msra.mxu0 %v228
    %938 = vmatprep.subr.mxu0 %v237
    %939 = vmatpush1.msra.mxu0 %v236
    %940 = vmatprep.subr.mxu0 %v245
    %941 = vmatpush1.msra.mxu0 %v244
    %942 = vmatprep.subr.mxu0 %v253
    %943 = vmatpush1.msra.mxu0 %v252
    %944 = vmatprep.subr.mxu0 %v261
    %945 = vmatpush1.msra.mxu0 %v260
    %946 = vmatprep.subr.mxu0 %v269
    %947 = vmatpush1.msra.mxu0 %v268
    %948 = vmatprep.subr.mxu0 %v277
    %949 = vmatpush1.msra.mxu0 %v276
    %950 = vmatprep.subr.mxu0 %v285
    %951 = vmatpush1.msra.mxu0 %v284
    %952 = vmatprep.subr.mxu0 %v293
    %953 = vmatpush1.msra.mxu0 %v292
    %954 = vmatprep.subr.mxu0 %v301
    %955 = vmatpush1.msra.mxu0 %v300
    %956 = vmatprep.subr.mxu0 %v309
    %957 = vmatpush1.msra.mxu0 %v308
    %958 = vmatprep.mubr.f32.mxu0 %v53
    %959 = vmatmul.mubr.f32.gmra.mrb[0].mxu0 %v52
    %v960 = vpop.f32.mrb[0].mxu0
    %v961 = vadd.f32 %v589, %v960
    %v962 = vpop.f32.mrb[0].mxu0
    %v963 = vadd.f32 %v593, %v962
    %964 = vdwg.mxu0
    %965 = vmatprep.subr.mxu0 %v317
    %966 = vmatpush1.msra.mxu0 %v316
    %967 = vmatprep.subr.mxu0 %v325
    %968 = vmatpush1.msra.mxu0 %v324
    %969 = vmatprep.subr.mxu0 %v333
    %970 = vmatpush1.msra.mxu0 %v332
    %971 = vmatprep.subr.mxu0 %v341
    %972 = vmatpush1.msra.mxu0 %v340
    %973 = vmatprep.subr.mxu0 %v349
    %974 = vmatpush1.msra.mxu0 %v348
    %975 = vmatprep.subr.mxu0 %v357
    %976 = vmatpush1.msra.mxu0 %v356
    %977 = vmatprep.subr.mxu0 %v365
    %978 = vmatpush1.msra.mxu0 %v364
    %979 = vmatprep.subr.mxu0 %v373
    %980 = vmatpush1.msra.mxu0 %v372
    %981 = vmatprep.subr.mxu0 %v381
    %982 = vmatpush1.msra.mxu0 %v380
    %983 = vmatprep.subr.mxu0 %v389
    %984 = vmatpush1.msra.mxu0 %v388
    %985 = vmatprep.subr.mxu0 %v397
    %986 = vmatpush1.msra.mxu0 %v396
    %987 = vmatprep.subr.mxu0 %v405
    %988 = vmatpush1.msra.mxu0 %v404
    %989 = vmatprep.subr.mxu0 %v413
    %990 = vmatpush1.msra.mxu0 %v412
    %991 = vmatprep.subr.mxu0 %v421
    %992 = vmatpush1.msra.mxu0 %v420
    %993 = vmatprep.subr.mxu0 %v429
    %994 = vmatpush1.msra.mxu0 %v428
    %995 = vmatprep.subr.mxu0 %v437
    %996 = vmatpush1.msra.mxu0 %v436
    %997 = vmatprep.subr.mxu0 %v445
    %998 = vmatpush1.msra.mxu0 %v444
    %999 = vmatprep.subr.mxu0 %v453
    %1000 = vmatpush1.msra.mxu0 %v452
    %1001 = vmatprep.subr.mxu0 %v461
    %1002 = vmatpush1.msra.mxu0 %v460
    %1003 = vmatprep.subr.mxu0 %v469
    %1004 = vmatpush1.msra.mxu0 %v468
    %1005 = vmatprep.subr.mxu0 %v477
    %1006 = vmatpush1.msra.mxu0 %v476
    %1007 = vmatprep.subr.mxu0 %v485
    %1008 = vmatpush1.msra.mxu0 %v484
    %1009 = vmatprep.subr.mxu0 %v493
    %1010 = vmatpush1.msra.mxu0 %v492
    %1011 = vmatprep.subr.mxu0 %v501
    %1012 = vmatpush1.msra.mxu0 %v500
    %1013 = vmatprep.subr.mxu0 %v509
    %1014 = vmatpush1.msra.mxu0 %v508
    %1015 = vmatprep.subr.mxu0 %v517
    %1016 = vmatpush1.msra.mxu0 %v516
    %1017 = vmatprep.subr.mxu0 %v525
    %1018 = vmatpush1.msra.mxu0 %v524
    %1019 = vmatprep.subr.mxu0 %v533
    %1020 = vmatpush1.msra.mxu0 %v532
    %1021 = vmatprep.subr.mxu0 %v541
    %1022 = vmatpush1.msra.mxu0 %v540
    %1023 = vmatprep.subr.mxu0 %v549
    %1024 = vmatpush1.msra.mxu0 %v548
    %1025 = vmatprep.subr.mxu0 %v557
    %1026 = vmatpush1.msra.mxu0 %v556
    %1027 = vmatprep.subr.mxu0 %v565
    %1028 = vmatpush1.msra.mxu0 %v564
    %1029 = vmatprep.mubr.f32.mxu0 %v55
    %1030 = vmatmul.mubr.f32.gmra.mrb[0].mxu0 %v54
    %v1031 = vpop.f32.mrb[0].mxu0
    %v1032 = vadd.f32 %v961, %v1031
    %v1033 = vpop.f32.mrb[0].mxu0
    %v1034 = vadd.f32 %v963, %v1033
    %1035 = vdwg.mxu0
    %1036 = vmatprep.subr.mxu0 %v63
    %1037 = vmatpush1.msra.mxu0 %v62
    %1038 = vmatprep.subr.mxu0 %v71
    %1039 = vmatpush1.msra.mxu0 %v70
    %1040 = vmatprep.subr.mxu0 %v79
    %1041 = vmatpush1.msra.mxu0 %v78
    %1042 = vmatprep.subr.mxu0 %v87
    %1043 = vmatpush1.msra.mxu0 %v86
    %1044 = vmatprep.subr.mxu0 %v95
    %1045 = vmatpush1.msra.mxu0 %v94
    %1046 = vmatprep.subr.mxu0 %v103
    %1047 = vmatpush1.msra.mxu0 %v102
    %1048 = vmatprep.subr.mxu0 %v111
    %1049 = vmatpush1.msra.mxu0 %v110
    %1050 = vmatprep.subr.mxu0 %v119
    %1051 = vmatpush1.msra.mxu0 %v118
    %1052 = vmatprep.subr.mxu0 %v127
    %1053 = vmatpush1.msra.mxu0 %v126
    %1054 = vmatprep.subr.mxu0 %v135
    %1055 = vmatpush1.msra.mxu0 %v134
    %1056 = vmatprep.subr.mxu0 %v143
    %1057 = vmatpush1.msra.mxu0 %v142
    %1058 = vmatprep.subr.mxu0 %v151
    %1059 = vmatpush1.msra.mxu0 %v150
    %1060 = vmatprep.subr.mxu0 %v159
    %1061 = vmatpush1.msra.mxu0 %v158
    %1062 = vmatprep.subr.mxu0 %v167
    %1063 = vmatpush1.msra.mxu0 %v166
    %1064 = vmatprep.subr.mxu0 %v175
    %1065 = vmatpush1.msra.mxu0 %v174
    %1066 = vmatprep.subr.mxu0 %v183
    %1067 = vmatpush1.msra.mxu0 %v182
    %1068 = vmatprep.subr.mxu0 %v191
    %1069 = vmatpush1.msra.mxu0 %v190
    %1070 = vmatprep.subr.mxu0 %v199
    %1071 = vmatpush1.msra.mxu0 %v198
    %1072 = vmatprep.subr.mxu0 %v207
    %1073 = vmatpush1.msra.mxu0 %v206
    %1074 = vmatprep.subr.mxu0 %v215
    %1075 = vmatpush1.msra.mxu0 %v214
    %1076 = vmatprep.subr.mxu0 %v223
    %1077 = vmatpush1.msra.mxu0 %v222
    %1078 = vmatprep.subr.mxu0 %v231
    %1079 = vmatpush1.msra.mxu0 %v230
    %1080 = vmatprep.subr.mxu0 %v239
    %1081 = vmatpush1.msra.mxu0 %v238
    %1082 = vmatprep.subr.mxu0 %v247
    %1083 = vmatpush1.msra.mxu0 %v246
    %1084 = vmatprep.subr.mxu0 %v255
    %1085 = vmatpush1.msra.mxu0 %v254
    %1086 = vmatprep.subr.mxu0 %v263
    %1087 = vmatpush1.msra.mxu0 %v262
    %1088 = vmatprep.subr.mxu0 %v271
    %1089 = vmatpush1.msra.mxu0 %v270
    %1090 = vmatprep.subr.mxu0 %v279
    %1091 = vmatpush1.msra.mxu0 %v278
    %1092 = vmatprep.subr.mxu0 %v287
    %1093 = vmatpush1.msra.mxu0 %v286
    %1094 = vmatprep.subr.mxu0 %v295
    %1095 = vmatpush1.msra.mxu0 %v294
    %1096 = vmatprep.subr.mxu0 %v303
    %1097 = vmatpush1.msra.mxu0 %v302
    %1098 = vmatprep.subr.mxu0 %v311
    %1099 = vmatpush1.msra.mxu0 %v310
    %1100 = vmatprep.mubr.f32.mxu0 %v53
    %1101 = vmatmul.mubr.f32.gmra.mrb[0].mxu0 %v52
    %v1102 = vpop.f32.mrb[0].mxu0
    %v1103 = vadd.f32 %v597, %v1102
    %v1104 = vpop.f32.mrb[0].mxu0
    %v1105 = vadd.f32 %v601, %v1104
    %1106 = vdwg.mxu0
    %1107 = vmatprep.subr.mxu0 %v319
    %1108 = vmatpush1.msra.mxu0 %v318
    %1109 = vmatprep.subr.mxu0 %v327
    %1110 = vmatpush1.msra.mxu0 %v326
    %1111 = vmatprep.subr.mxu0 %v335
    %1112 = vmatpush1.msra.mxu0 %v334
    %1113 = vmatprep.subr.mxu0 %v343
    %1114 = vmatpush1.msra.mxu0 %v342
    %1115 = vmatprep.subr.mxu0 %v351
    %1116 = vmatpush1.msra.mxu0 %v350
    %1117 = vmatprep.subr.mxu0 %v359
    %1118 = vmatpush1.msra.mxu0 %v358
    %1119 = vmatprep.subr.mxu0 %v367
    %1120 = vmatpush1.msra.mxu0 %v366
    %1121 = vmatprep.subr.mxu0 %v375
    %1122 = vmatpush1.msra.mxu0 %v374
    %1123 = vmatprep.subr.mxu0 %v383
    %1124 = vmatpush1.msra.mxu0 %v382
    %1125 = vmatprep.subr.mxu0 %v391
    %1126 = vmatpush1.msra.mxu0 %v390
    %1127 = vmatprep.subr.mxu0 %v399
    %1128 = vmatpush1.msra.mxu0 %v398
    %1129 = vmatprep.subr.mxu0 %v407
    %1130 = vmatpush1.msra.mxu0 %v406
    %1131 = vmatprep.subr.mxu0 %v415
    %1132 = vmatpush1.msra.mxu0 %v414
    %1133 = vmatprep.subr.mxu0 %v423
    %1134 = vmatpush1.msra.mxu0 %v422
    %1135 = vmatprep.subr.mxu0 %v431
    %1136 = vmatpush1.msra.mxu0 %v430
    %1137 = vmatprep.subr.mxu0 %v439
    %1138 = vmatpush1.msra.mxu0 %v438
    %1139 = vmatprep.subr.mxu0 %v447
    %1140 = vmatpush1.msra.mxu0 %v446
    %1141 = vmatprep.subr.mxu0 %v455
    %1142 = vmatpush1.msra.mxu0 %v454
    %1143 = vmatprep.subr.mxu0 %v463
    %1144 = vmatpush1.msra.mxu0 %v462
    %1145 = vmatprep.subr.mxu0 %v471
    %1146 = vmatpush1.msra.mxu0 %v470
    %1147 = vmatprep.subr.mxu0 %v479
    %1148 = vmatpush1.msra.mxu0 %v478
    %1149 = vmatprep.subr.mxu0 %v487
    %1150 = vmatpush1.msra.mxu0 %v486
    %1151 = vmatprep.subr.mxu0 %v495
    %1152 = vmatpush1.msra.mxu0 %v494
    %1153 = vmatprep.subr.mxu0 %v503
    %1154 = vmatpush1.msra.mxu0 %v502
    %1155 = vmatprep.subr.mxu0 %v511
    %1156 = vmatpush1.msra.mxu0 %v510
    %1157 = vmatprep.subr.mxu0 %v519
    %1158 = vmatpush1.msra.mxu0 %v518
    %1159 = vmatprep.subr.mxu0 %v527
    %1160 = vmatpush1.msra.mxu0 %v526
    %1161 = vmatprep.subr.mxu0 %v535
    %1162 = vmatpush1.msra.mxu0 %v534
    %1163 = vmatprep.subr.mxu0 %v543
    %1164 = vmatpush1.msra.mxu0 %v542
    %1165 = vmatprep.subr.mxu0 %v551
    %1166 = vmatpush1.msra.mxu0 %v550
    %1167 = vmatprep.subr.mxu0 %v559
    %1168 = vmatpush1.msra.mxu0 %v558
    %1169 = vmatprep.subr.mxu0 %v567
    %1170 = vmatpush1.msra.mxu0 %v566
    %1171 = vmatprep.mubr.f32.mxu0 %v55
    %1172 = vmatmul.mubr.f32.gmra.mrb[0].mxu0 %v54
    %v1173 = vpop.f32.mrb[0].mxu0
    %v1174 = vadd.f32 %v1103, %v1173
    %v1175 = vpop.f32.mrb[0].mxu0
    %v1176 = vadd.f32 %v1105, %v1175
    %1177 = vdwg.mxu0
    %1178 = vst [vmem:[#allocation8] sm:$0xff] %v748
    %1179 = vst [vmem:[#allocation8 + $0x8] sm:$0xff] %v750
    %1180 = vst [vmem:[#allocation8 + $0x10] sm:$0xff] %v890
    %1181 = vst [vmem:[#allocation8 + $0x18] sm:$0xff] %v892
    %1182 = vst [vmem:[#allocation8 + $0x20] sm:$0xff] %v1032
    %1183 = vst [vmem:[#allocation8 + $0x28] sm:$0xff] %v1034
    %1184 = vst [vmem:[#allocation8 + $0x30] sm:$0xff] %v1174
    %1185 = vst [vmem:[#allocation8 + $0x38] sm:$0xff] %v1176
    // Predicated region
    $region26: #{inverse_log_gabor_mapper.1} parent=1 // pred_check
      _
    $region27: #{inverse_log_gabor_mapper.1} parent=1 // pred_check_branch
      %1187 = sbr.rel (0) target = $region29
    $region28: #{inverse_log_gabor_mapper.1} parent=1 // pred_region
      %s1189 = ssub.s32 1024, 1024
      %1190 = vsyncadd [#allocation4], %s1189
      %s1192 = sshll.u32 [#allocation8], 4
      %s1193 = int_to_ptr.vmem [resolvable:$true] %s1192
      %1195 = dma.vmem_to_hbm [thread:$0]  %s1193, 1024, %s3, [#allocation4]
    $region29: #{inverse_log_gabor_mapper.1} parent=1 // pred_fallthru
      _
    // Predicated region
    $region30: #{inverse_log_gabor_mapper.1} parent=1 // pred_check
      _
    $region31: #{inverse_log_gabor_mapper.1} parent=1 // pred_check_branch
      %1197 = sbr.rel (0) target = $region33
    $region32: #{inverse_log_gabor_mapper.1} parent=1 // pred_region
      %1198 = dma.done [#allocation4], 1024
    $region33: #{inverse_log_gabor_mapper.1} parent=1 // pred_fallthru
      _
    %1199 = vsyncpa [#allocation3], 1
    %1200 = vsyncpa [#allocation6], 1
    %1201 = vsyncpa [#allocation4], 1

</llo_original>
